<compile_context>
chip_gen: v5e
topology: v5e:2x2
jax: 0.10.0
libtpu: 0.0.40
codegen_flags: <defaults>
</compile_context>

<pallas_src>
import functools
import math

import jax
import jax.numpy as jnp
from jax.experimental import pallas as pl
from jax.experimental.pallas import tpu as pltpu

WIDTH = 1024      # lane-dense last dim (multiple of 128)
ACC_ROWS = 8      # max-abs accumulator sublane extent (one vreg tall)


# --------------------------- generation tuning ----------------------------- #

@functools.lru_cache(maxsize=None)
def _device_kind():
    try:
        return jax.devices()[0].device_kind.lower()
    except Exception:
        return ""


@functools.lru_cache(maxsize=None)
def _target_block_bytes():
    # ~4 MiB blocks on v6e/v7x (32 MiB scoped-VMEM default); ~2 MiB elsewhere
    # so in+out double buffering stays well inside v5e's 16 MiB scoped default.
    kind = _device_kind()
    if "v6" in kind or "v7" in kind:
        return 4 * 1024 * 1024
    return 2 * 1024 * 1024


@functools.lru_cache(maxsize=None)
def _num_tensorcores():
    # Outer "parallel" split for the max-abs stream: 2 TensorCores on v7x,
    # 1 on v5e/v6e (a split >1 there only creates grid rounding overhead).
    return 2 if "v7" in _device_kind() else 1


# ----------------------------- Pallas kernels ------------------------------ #

def _max_abs_kernel(x_ref, o_ref, acc_ref, *, block_rows, acc_rows, inner,
                    total_blocks, valid_rows, need_row_mask):
    """Two-level global max(|x|).

    Per inner step: |x| in the native dtype plus pure-VPU cross-vreg maxes
    folding the (block_rows, WIDTH) tile into the small (acc_rows, WIDTH)
    running max.  Only the ragged last block (if any) pays the row mask.
    The tiny partial is upcast to f32 and stored once per outer split.
    """
    i = pl.program_id(1)

    @pl.when(i == 0)
    def _():
        acc_ref[...] = jnp.zeros_like(acc_ref)

    ax = jnp.abs(x_ref[...])

    def fold(a):
        if block_rows == acc_rows:
            return a
        return a.reshape(block_rows // acc_rows, acc_rows, WIDTH).max(axis=0)

    if need_row_mask:
        o = pl.program_id(0)
        blk = jnp.minimum(o * inner + i, total_blocks - 1)

        @pl.when(blk != total_blocks - 1)
        def _():
            acc_ref[...] = jnp.maximum(acc_ref[...], fold(ax))

        @pl.when(blk == total_blocks - 1)
        def _():
            row_start = (total_blocks - 1) * block_rows
            row_ids = row_start + jax.lax.broadcasted_iota(jnp.int32, ax.shape, 0)
            masked = jnp.where(row_ids < valid_rows, ax, jnp.zeros_like(ax))
            acc_ref[...] = jnp.maximum(acc_ref[...], fold(masked))
    else:
        acc_ref[...] = jnp.maximum(acc_ref[...], fold(ax))

    @pl.when(i == pl.num_programs(1) - 1)
    def _():
        o_ref[...] = acc_ref[...].astype(o_ref.dtype)


def _quant_kernel(x_ref, o_ref, *, inv_delta, delta, min_val, max_val):
    # floor(x / delta + 0.5) == floor(x * 2**sf + 0.5) exactly (delta = 2**-sf).
    # TODO(synk): on v7x bf16 the f32 upcast/downcast puts this near the VALU
    # roofline; a native-bf16 path is possible for small bit widths.
    x = x_ref[...].astype(jnp.float32)
    rounded = jnp.floor(x * inv_delta + 0.5)
    o_ref[...] = (jnp.clip(rounded, min_val, max_val) * delta).astype(o_ref.dtype)


def _sign_kernel(x_ref, o_ref):
    # bits == 1 branch of linear_quantize: sign(x) - 1
    x = x_ref[...].astype(jnp.float32)
    o_ref[...] = (jnp.sign(x) - 1.0).astype(o_ref.dtype)


# ------------------------------ JAX glue ----------------------------------- #

def _split_aligned(x):
    """Split x into a lane-dense (rows, WIDTH) view of the WIDTH-aligned prefix
    and a (<WIDTH,) ragged tail, with no pad/unpad HBM round trips."""
    flat = x.reshape(-1)
    n = flat.shape[0]
    n_aligned = (n // WIDTH) * WIDTH
    if n_aligned == n:                       # common case: free reshape only
        x2d = flat.reshape(n // WIDTH, WIDTH) if n else None
        return x2d, None
    x2d = flat[:n_aligned].reshape(n_aligned // WIDTH, WIDTH) if n_aligned else None
    tail = flat[n_aligned:]
    return x2d, tail


def _pick_block_rows(rows, dtype):
    """~2-4 MiB blocks; a multiple of 8 sublanes or the full row extent."""
    bytes_per_row = WIDTH * jnp.dtype(dtype).itemsize
    br = max(ACC_ROWS, _target_block_bytes() // bytes_per_row)
    if rows <= br:
        return int(rows)                     # block == full array dim
    return int((br // ACC_ROWS) * ACC_ROWS)


def pallas_max_abs(x, block_rows=None):
    """Global max(|x|) with a (parallel outer, arbitrary inner) grid."""
    x2d, tail = _split_aligned(x)
    parts = []

    if x2d is not None:
        rows = x2d.shape[0]
        if block_rows is None:
            block_rows = _pick_block_rows(rows, x2d.dtype)
        acc_rows = ACC_ROWS if block_rows % ACC_ROWS == 0 else block_rows
        total_blocks = pl.cdiv(rows, block_rows)
        outer = min(_num_tensorcores(), total_blocks)
        inner = pl.cdiv(total_blocks, outer)
        need_row_mask = (rows % block_rows) != 0
        clamp = (outer * inner) != total_blocks

        if clamp:
            # Over-shooting last split revisits a valid block (idempotent for max).
            in_map = lambda o, i: (jnp.minimum(o * inner + i, total_blocks - 1), 0)
        else:
            in_map = lambda o, i: (o * inner + i, 0)

        kernel = functools.partial(
            _max_abs_kernel, block_rows=block_rows, acc_rows=acc_rows,
            inner=inner, total_blocks=total_blocks, valid_rows=rows,
            need_row_mask=need_row_mask)

        partials = pl.pallas_call(
            kernel,
            out_shape=jax.ShapeDtypeStruct((outer * acc_rows, WIDTH), jnp.float32),
            grid_spec=pltpu.PrefetchScalarGridSpec(
                num_scalar_prefetch=0,
                grid=(outer, inner),
                in_specs=[pl.BlockSpec((block_rows, WIDTH), in_map)],
                out_specs=pl.BlockSpec((acc_rows, WIDTH), lambda o, i: (o, 0)),
                scratch_shapes=[pltpu.VMEM((acc_rows, WIDTH), x2d.dtype)]),
            compiler_params=pltpu.CompilerParams(
                dimension_semantics=("parallel", "arbitrary")),
        )(x2d)
        parts.append(jnp.max(partials))      # tiny finish in plain XLA

    if tail is not None:
        parts.append(jnp.max(jnp.abs(tail.astype(jnp.float32))))

    return parts[0] if len(parts) == 1 else jnp.maximum(parts[0], parts[1])


def _xla_linear_quantize(x, sf, bits):
    """Plain-XLA quantization (used only for the <WIDTH-element ragged tail)."""
    xf = x.astype(jnp.float32)
    if bits == 1:
        return (jnp.sign(xf) - 1.0).astype(x.dtype)
    delta = math.pow(2.0, -sf)
    bound = math.pow(2.0, bits - 1)
    rounded = jnp.floor(xf * math.pow(2.0, sf) + 0.5)
    return (jnp.clip(rounded, -bound, bound - 1) * delta).astype(x.dtype)


def pallas_linear_quantize(x, sf, bits, block_rows=None):
    assert bits >= 1, bits
    orig_shape = x.shape
    x2d, tail = _split_aligned(x)
    pieces = []

    if x2d is not None:
        rows = x2d.shape[0]
        if block_rows is None:
            block_rows = _pick_block_rows(rows, x2d.dtype)
        grid = (pl.cdiv(rows, block_rows),)

        if bits == 1:
            kernel = _sign_kernel
        else:
            bound = math.pow(2.0, bits - 1)
            kernel = functools.partial(
                _quant_kernel,
                inv_delta=math.pow(2.0, sf),   # exact: delta is a power of two
                delta=math.pow(2.0, -sf),
                min_val=-bound, max_val=bound - 1)

        out2d = pl.pallas_call(
            kernel,
            out_shape=jax.ShapeDtypeStruct(x2d.shape, x2d.dtype),
            grid_spec=pltpu.PrefetchScalarGridSpec(
                num_scalar_prefetch=0,
                grid=grid,
                in_specs=[pl.BlockSpec((block_rows, WIDTH), lambda i: (i, 0))],
                out_specs=pl.BlockSpec((block_rows, WIDTH), lambda i: (i, 0))),
            compiler_params=pltpu.CompilerParams(
                dimension_semantics=("parallel",)),
        )(x2d)
        pieces.append(out2d.reshape(-1))

    if tail is not None:
        # TODO(synk): the <1024-element ragged tail is quantized in plain XLA.
        pieces.append(_xla_linear_quantize(tail, sf, bits))

    out = pieces[0] if len(pieces) == 1 else jnp.concatenate(pieces)
    return out.reshape(orig_shape)


class LinearQuant:
    """JAX/Pallas port of the PyTorch LinearQuant module."""

    def __init__(self, name, bits, sf=None, overflow_rate=0.0, counter=10):
        self.name = name
        self._counter = counter
        self.bits = bits
        self.sf = sf
        self.overflow_rate = overflow_rate

    @property
    def counter(self):
        return self._counter

    def _compute_integral_part(self, x):
        if self.overflow_rate == 0.0:
            # split_idx == 0 -> threshold is the global max(|x|): Pallas kernel.
            v = float(jax.device_get(pallas_max_abs(x)))
        else:
            # TODO(synk): sort/top-k threshold has no clean Pallas equivalent;
            # computed in plain JAX for overflow_rate > 0.
            abs_sorted = jnp.sort(jnp.abs(x).reshape(-1))[::-1]
            split_idx = int(self.overflow_rate * abs_sorted.shape[0])
            v = float(jax.device_get(abs_sorted[split_idx]))
        return math.ceil(math.log2(v + 1e-12))

    def forward(self, x):
        if self._counter > 0:
            self._counter -= 1
            sf_new = self.bits - 1 - self._compute_integral_part(x)
            self.sf = min(self.sf, sf_new) if self.sf is not None else sf_new
            return x
        else:
            return pallas_linear_quantize(x, self.sf, self.bits)

    __call__ = forward

    def __repr__(self):
        return '{}(sf={}, bits={}, overflow_rate={:.3f}, counter={})'.format(
            self.__class__.__name__, self.sf, self.bits,
            self.overflow_rate, self.counter)


# ------------------------------ reference ---------------------------------- #

def _ref_linear_quantize(x, sf, bits):
    xf = x.astype(jnp.float32)
    if bits == 1:
        return (jnp.sign(xf) - 1.0).astype(x.dtype)
    delta = math.pow(2.0, -sf)
    bound = math.pow(2.0, bits - 1)
    rounded = jnp.floor(xf / delta + 0.5)
    return (jnp.clip(rounded, -bound, bound - 1) * delta).astype(x.dtype)


if __name__ == "__main__":
    key = jax.random.PRNGKey(0)
    x = jax.random.normal(key, (2, 4, 16, 16), dtype=jnp.float32)

    # counter=1: first call calibrates sf (Pallas max-abs), second quantizes.
    quant = LinearQuant(name="act", bits=8, sf=None,
                        overflow_rate=0.0, counter=1)

    y_cal = quant(x)                 # calibration pass: returns x, sets sf
    jax.block_until_ready(y_cal)
    assert quant.counter == 0 and quant.sf is not None

    y = quant(x)                     # quantization pass: Pallas quant kernel
    jax.block_until_ready(y)

    y_ref = _ref_linear_quantize(x, quant.sf, quant.bits)
    assert y.shape == x.shape and y.dtype == x.dtype
    assert float(jnp.max(jnp.abs(y - y_ref))) < 1e-6

    # Ragged size smaller than WIDTH: pure-XLA tail path.
    x2 = jax.random.normal(jax.random.PRNGKey(1), (3, 5, 7), dtype=jnp.float32)
    assert abs(float(pallas_max_abs(x2)) - float(jnp.max(jnp.abs(x2)))) < 1e-6
    y2 = pallas_linear_quantize(x2, sf=4, bits=8)
    assert float(jnp.max(jnp.abs(y2 - _ref_linear_quantize(x2, 4, 8)))) < 1e-6

    # Mixed aligned-prefix + ragged tail (kernel + XLA tail, concatenated).
    xm = jax.random.normal(jax.random.PRNGKey(5), (5, 1000), dtype=jnp.float32)
    assert abs(float(pallas_max_abs(xm)) - float(jnp.max(jnp.abs(xm)))) < 1e-6
    ym = pallas_linear_quantize(xm, sf=4, bits=8)
    assert float(jnp.max(jnp.abs(ym - _ref_linear_quantize(xm, 4, 8)))) < 1e-6

    # Multi-block two-level max (aligned rows) + ragged-rows masked path.
    x3 = jax.random.normal(jax.random.PRNGKey(2), (24, WIDTH), dtype=jnp.float32)
    assert abs(float(pallas_max_abs(x3, block_rows=8))
               - float(jnp.max(jnp.abs(x3)))) < 1e-6
    assert abs(float(pallas_max_abs(x3, block_rows=16))
               - float(jnp.max(jnp.abs(x3)))) < 1e-6
    y3 = pallas_linear_quantize(x3, sf=5, bits=6, block_rows=16)
    assert float(jnp.max(jnp.abs(y3 - _ref_linear_quantize(x3, 5, 6)))) < 1e-6

    # bf16: native-dtype running max + dtype-preserving quantization.
    xb = jax.random.normal(jax.random.PRNGKey(3), (8, WIDTH)).astype(jnp.bfloat16)
    assert abs(float(pallas_max_abs(xb))
               - float(jnp.max(jnp.abs(xb.astype(jnp.float32))))) < 1e-6
    yb = pallas_linear_quantize(xb, sf=4, bits=8)
    assert yb.dtype == jnp.bfloat16
    assert float(jnp.max(jnp.abs(yb.astype(jnp.float32)
                                 - _ref_linear_quantize(xb, 4, 8)
                                 .astype(jnp.float32)))) < 1e-6

    print("KERNEL_OK")
</pallas_src>

<mosaic_0001>
module attributes {stable_mosaic.version = 11 : i64} {
  func.func @_max_abs_kernel(%arg0: i32, %arg1: i32, %arg2: memref<2x1024xf32, #tpu.memory_space<vmem>>, %arg3: memref<2x1024xf32, #tpu.memory_space<vmem>>, %arg4: memref<2x1024xf32, #tpu.memory_space<vmem>>) attributes {dimension_semantics = [#tpu.dimension_semantics<parallel>, #tpu.dimension_semantics<arbitrary>], iteration_bounds = array<i64: 1, 1>, scalar_prefetch = 0 : i64, scratch_operands = 1 : i64, tpu.core_type = #tpu.core_type<tc>, window_params = [{transform_indices = @transform_0, window_bounds = array<i64: 2, 1024>}, {transform_indices = @transform_1, window_bounds = array<i64: 2, 1024>}]} {
    %c0_i32 = arith.constant 0 : i32
    %0 = arith.cmpi eq, %arg1, %c0_i32 : i32
    %1 = arith.extui %0 : i1 to i32
    %c0_i32_0 = arith.constant 0 : i32
    %2 = arith.cmpi ne, %1, %c0_i32_0 : i32
    scf.if %2 {
      %cst = arith.constant 0.000000e+00 : f32
      %11 = vector.broadcast %cst : f32 to vector<2x1024xf32>
      %c0_8 = arith.constant 0 : index
      %c0_9 = arith.constant 0 : index
      %12 = vector.load %arg4[%c0_8, %c0_9] : memref<2x1024xf32, #tpu.memory_space<vmem>>, vector<2x1024xf32>
      tpu.vector_store %arg4[%c0_8, %c0_9], %11 {strides = array<i32>} : memref<2x1024xf32, #tpu.memory_space<vmem>>, vector<2x1024xf32>,
    } else {
    }
    %c0 = arith.constant 0 : index
    %c0_1 = arith.constant 0 : index
    %3 = vector.load %arg2[%c0, %c0_1] : memref<2x1024xf32, #tpu.memory_space<vmem>>, vector<2x1024xf32>
    %4 = math.absf %3 : vector<2x1024xf32>
    %c0_2 = arith.constant 0 : index
    %c0_3 = arith.constant 0 : index
    %5 = vector.load %arg4[%c0_2, %c0_3] : memref<2x1024xf32, #tpu.memory_space<vmem>>, vector<2x1024xf32>
    %6 = arith.maximumf %5, %4 : vector<2x1024xf32>
    %c0_4 = arith.constant 0 : index
    %c0_5 = arith.constant 0 : index
    %7 = vector.load %arg4[%c0_4, %c0_5] : memref<2x1024xf32, #tpu.memory_space<vmem>>, vector<2x1024xf32>
    tpu.vector_store %arg4[%c0_4, %c0_5], %6 {strides = array<i32>} : memref<2x1024xf32, #tpu.memory_space<vmem>>, vector<2x1024xf32>,
    %c0_i32_6 = arith.constant 0 : i32
    %8 = arith.cmpi eq, %arg1, %c0_i32_6 : i32
    %9 = arith.extui %8 : i1 to i32
    %c0_i32_7 = arith.constant 0 : i32
    %10 = arith.cmpi ne, %9, %c0_i32_7 : i32
    scf.if %10 {
      %c0_8 = arith.constant 0 : index
      %c0_9 = arith.constant 0 : index
      %11 = vector.load %arg4[%c0_8, %c0_9] : memref<2x1024xf32, #tpu.memory_space<vmem>>, vector<2x1024xf32>
      %c0_10 = arith.constant 0 : index
      %c0_11 = arith.constant 0 : index
      %12 = vector.load %arg3[%c0_10, %c0_11] : memref<2x1024xf32, #tpu.memory_space<vmem>>, vector<2x1024xf32>
      tpu.vector_store %arg3[%c0_10, %c0_11], %11 {strides = array<i32>} : memref<2x1024xf32, #tpu.memory_space<vmem>>, vector<2x1024xf32>,
    } else {
    }
    return
  }
  func.func @transform_0(%arg0: i32, %arg1: i32) -> (i32, i32) {
    %c1_i32 = arith.constant 1 : i32
    %0 = arith.muli %arg0, %c1_i32 : i32
    %1 = arith.addi %0, %arg1 : i32
    %c0_i32 = arith.constant 0 : i32
    %c0_i32_0 = arith.constant 0 : i32
    return %1, %c0_i32 : i32, i32
  }
  func.func @transform_1(%arg0: i32, %arg1: i32) -> (i32, i32) {
    %c0_i32 = arith.constant 0 : i32
    %c0_i32_0 = arith.constant 0 : i32
    return %arg0, %c0_i32 : i32, i32
  }
}

</mosaic_0001>

<llo_original>
// kernel: tpu_custom_call.1
$region0: #{tpu_custom_call.1}
  #allocation0 [shape = 'u32[]', space=smem, size = 0x4, offset = 0x4, fixed_abs, tag = 'smem constant byte address 0x4 - core index']
  #allocation1 [shape = 'u32[72,128]{1,0:T(1,128)}', space=vmem, size = 0x9000, scoped, tag = 'internal scratch']
  #allocation2 [shape = 'f32[2,1024]{1,0:T(2,128)}', space=vmem, size = 0x2000, scoped, tag = 'scratch operand']
  %s0 = inlined_call_operand.hbm [shape: f32[2,1024], index: 0, kind: input, shape index: {}]
  %s1 = inlined_call_operand.hbm [shape: f32[2,1024], index: 1, kind: output, shape index: {}]
  %s2 = sld [smem:[#allocation0]]
  $region26: #{tpu_custom_call.1} parent=0
    _
  %s4 = ssub.s32 1, %s2
  %s5 = scalar_select 0, %s4, %s2
  $region1: #{tpu_custom_call.1} parent=0
    #allocation3 [shape = 'u8[8192]{0}', space=vmem, size = 0x2000, scoped, tag = 'input window, operand 0, single buffered']
    #allocation4 [shape = 's32[1]{0}', space=sflag, size = 0x4, scoped, tag = 'scoped memory for tpu_custom_call.1']
    #allocation5 [shape = 's32[1]{0}', space=sflag, size = 0x4, scoped, tag = 'scoped memory for tpu_custom_call.1']
    #allocation6 [shape = 'u8[8192]{0}', space=vmem, size = 0x2000, scoped, tag = 'output window, operand 0, single buffered']
    %6 = vsyncpa [#allocation4], 0
    %7 = vsyncpa [#allocation5], 0
    // Predicated region
    $region2: #{tpu_custom_call.1} parent=1 // pred_check
      _
    $region3: #{tpu_custom_call.1} parent=1 // pred_check_branch
      %9 = sbr.rel (0) target = $region5
    $region4: #{tpu_custom_call.1} parent=1 // pred_region
      %s10 = sadd.s32 0, 0
      %12 = vsyncadd [#allocation4], 0
      %s13 = smul.addr %s10, 8
      %s14 = smul.addr %s13, 2
      %s15 = scalar_lea.hbm %s0, %s14
      %s17 = sshll.u32 %s15, 4
      %s18 = int_to_ptr.hbm [resolvable:$true] %s17
      %s19 = sshll.u32 [#allocation3], 4
      %s20 = int_to_ptr.vmem [resolvable:$true] %s19
      %22 = dma.hbm_to_vmem [thread:$0]  %s18, 256, %s20, [#allocation4]
    $region5: #{tpu_custom_call.1} parent=1 // pred_fallthru
      _
    // Predicated region
    $region6: #{tpu_custom_call.1} parent=1 // pred_check
      _
    $region7: #{tpu_custom_call.1} parent=1 // pred_check_branch
      %24 = sbr.rel (0) target = $region9
    $region8: #{tpu_custom_call.1} parent=1 // pred_region
      %26 = dma.done [#allocation4], 256
    $region9: #{tpu_custom_call.1} parent=1 // pred_fallthru
      _
    %s27 = sadd.s32 0, 0
    %p28 = scmp.eq.s32.totalorder 0, 0
    // Predicated region
    $region10: #{tpu_custom_call.1} parent=1 // pred_check
      %p29 = pneg %p28
    $region11: #{tpu_custom_call.1} parent=1 // pred_check_branch
      %31 = sbr.rel (%p29) target = $region13
    $region12: #{tpu_custom_call.1} parent=1 // pred_region
      %32 = vst [vmem:[#allocation2] sm:$0xff] 0.0
      %33 = vst [vmem:[#allocation2 + $0x8] sm:$0xff] 0.0
    $region13: #{tpu_custom_call.1} parent=1 // pred_fallthru
      _
    %v34 = vld [vmem:[#allocation3] sm:$0xff]
    %v35 = vld [vmem:[#allocation3 + $0x8] sm:$0xff]
    %v36 = vand.u32 2147483647, %v34
    %v37 = vand.u32 2147483647, %v35
    %v38 = vld [vmem:[#allocation2] sm:$0xff]
    %v39 = vld [vmem:[#allocation2 + $0x8] sm:$0xff]
    %v40 = vmax.f32 %v38, %v36
    %v41 = vmax.f32 %v39, %v37
    %42 = vst [vmem:[#allocation2] sm:$0xff] %v40
    %43 = vst [vmem:[#allocation2 + $0x8] sm:$0xff] %v41
    // Predicated region
    $region14: #{tpu_custom_call.1} parent=1 // pred_check
      %p44 = pneg %p28
    $region15: #{tpu_custom_call.1} parent=1 // pred_check_branch
      %46 = sbr.rel (%p44) target = $region17
    $region16: #{tpu_custom_call.1} parent=1 // pred_region
      %v47 = vld [vmem:[#allocation2] sm:$0xff]
      %v48 = vld [vmem:[#allocation2 + $0x8] sm:$0xff]
      %49 = vst [vmem:[#allocation6] sm:$0xff] %v47
      %50 = vst [vmem:[#allocation6 + $0x8] sm:$0xff] %v48
    $region17: #{tpu_custom_call.1} parent=1 // pred_fallthru
      _
    // Predicated region
    $region18: #{tpu_custom_call.1} parent=1 // pred_check
      _
    $region19: #{tpu_custom_call.1} parent=1 // pred_check_branch
      %52 = sbr.rel (0) target = $region21
    $region20: #{tpu_custom_call.1} parent=1 // pred_region
      %54 = vsyncadd [#allocation5], 0
      %s56 = sshll.u32 [#allocation6], 4
      %s57 = int_to_ptr.vmem [resolvable:$true] %s56
      %s58 = sshll.u32 %s1, 4
      %s59 = int_to_ptr.hbm [resolvable:$true] %s58
      %61 = dma.vmem_to_hbm [thread:$0]  %s57, 256, %s59, [#allocation5]
    $region21: #{tpu_custom_call.1} parent=1 // pred_fallthru
      _
    // Predicated region
    $region22: #{tpu_custom_call.1} parent=1 // pred_check
      _
    $region23: #{tpu_custom_call.1} parent=1 // pred_check_branch
      %63 = sbr.rel (0) target = $region25
    $region24: #{tpu_custom_call.1} parent=1 // pred_region
      %65 = dma.done [#allocation5], 256
    $region25: #{tpu_custom_call.1} parent=1 // pred_fallthru
      _
    %66 = vsyncpa [#allocation4], 1
    %67 = vsyncpa [#allocation5], 1

</llo_original>
